<compile_context>
chip_gen: v5e
topology: v5e:2x2
jax: 0.10.0
libtpu: 0.0.40
codegen_flags: <defaults>
</compile_context>

<pallas_src>
import functools

import jax
import jax.numpy as jnp
from jax.experimental import pallas as pl
from jax.experimental.pallas import tpu as pltpu

_LANE = 128
_SUBLANE = 8


def _round_up(a, b):
    return ((a + b - 1) // b) * b


def _logistic_kernel(params_ref, x_ref, o_ref):
    # params_ref: (3,) f32 in SMEM (scalar prefetch): [w0, w1, b]
    # x_ref: (2, block_rows, 128) f32 in VMEM; x_ref[0]=feature0, x_ref[1]=feature1
    # o_ref: (block_rows, 128) f32 in VMEM
    w0 = params_ref[0]
    w1 = params_ref[1]
    b = params_ref[2]

    # VPU elementwise FMA (no MXU for a K=2 contraction).
    logits = x_ref[0] * w0 + x_ref[1] * w1 + b

    # sigmoid(z) = 0.5 * tanh(0.5 * z) + 0.5  -- stable, 1 EUP op + 2 FMAs.
    o_ref[...] = 0.5 * jnp.tanh(0.5 * logits) + 0.5


@functools.partial(jax.jit, static_argnames=("max_block_rows",))
def my_logistic_model(x, weight, bias, *, max_block_rows=2048):
    """Forward pass of MyLogisticModel.

    x:      (N, 2)  float
    weight: (1, 2)  float   (nn.Linear.weight)
    bias:   (1,)    float   (nn.Linear.bias)
    returns (N, 1)  float32
    """
    n = x.shape[0]
    xf = x.astype(jnp.float32)

    # Pack (w0, w1, b) into one SMEM scalar-prefetch array.
    params = jnp.concatenate(
        [weight.reshape(-1).astype(jnp.float32), bias.reshape(-1).astype(jnp.float32)]
    )  # (3,)

    # --- Lane-dense layout plumbing (single XLA pass over x) -----------------
    rows0 = max(1, -(-n // _LANE))          # rows of 128 samples
    rows0 = _round_up(rows0, _SUBLANE)      # sublane alignment

    grid_n = -(-rows0 // max_block_rows)    # VMEM-driven block cap
    if rows0 > _SUBLANE:
        grid_n = max(grid_n, 2)             # >=2 steps so v7x's 2 TCs both work
    block_rows = _round_up(-(-rows0 // grid_n), _SUBLANE)
    rows = grid_n * block_rows
    n_pad = rows * _LANE

    # One transpose+pad+reshape pass: (N,2) -> (2, rows, 128).
    xs = jnp.pad(xf.T, ((0, 0), (0, n_pad - n))).reshape(2, rows, _LANE)

    out = pl.pallas_call(
        _logistic_kernel,
        out_shape=jax.ShapeDtypeStruct((rows, _LANE), jnp.float32),
        grid_spec=pltpu.PrefetchScalarGridSpec(
            num_scalar_prefetch=1,
            grid=(grid_n,),
            in_specs=[
                pl.BlockSpec((2, block_rows, _LANE), lambda i, p: (0, i, 0)),
            ],
            out_specs=pl.BlockSpec((block_rows, _LANE), lambda i, p: (i, 0)),
        ),
        compiler_params=pltpu.CompilerParams(
            dimension_semantics=("parallel",),
        ),
    )(params, xs)

    # Back to the PyTorch-facing (N, 1) layout; free reshape when aligned.
    if n == n_pad:
        return out.reshape(n, 1)
    return out.reshape(-1)[:n].reshape(n, 1)


if __name__ == "__main__":
    key = jax.random.PRNGKey(0)
    kx, kw, kb, kx2, kx3 = jax.random.split(key, 5)

    # Small shapes implied by the module: in_features=2, out_features=1.
    N = 8
    x = jax.random.normal(kx, (N, 2), dtype=jnp.float32)

    # Deterministic "init" matching nn.Linear(2, 1) default uniform(-1/sqrt(2), 1/sqrt(2)).
    bound = 1.0 / jnp.sqrt(2.0)
    weight = jax.random.uniform(kw, (1, 2), minval=-bound, maxval=bound, dtype=jnp.float32)
    bias = jax.random.uniform(kb, (1,), minval=-bound, maxval=bound, dtype=jnp.float32)

    out = jax.block_until_ready(my_logistic_model(x, weight, bias))
    ref = jax.nn.sigmoid(x @ weight.T + bias)
    assert out.shape == (N, 1)
    assert jnp.allclose(out, ref, atol=2e-6), (out, ref)

    # Non-aligned N exercises the padding path (single block).
    N2 = 300
    x2 = jax.random.normal(kx2, (N2, 2), dtype=jnp.float32)
    out2 = jax.block_until_ready(my_logistic_model(x2, weight, bias))
    ref2 = jax.nn.sigmoid(x2 @ weight.T + bias)
    assert out2.shape == (N2, 1)
    assert jnp.allclose(out2, ref2, atol=2e-6), (out2, ref2)

    # Larger N exercises the multi-block (grid_n >= 2) path.
    N3 = 5000
    x3 = jax.random.normal(kx3, (N3, 2), dtype=jnp.float32)
    out3 = jax.block_until_ready(my_logistic_model(x3, weight, bias))
    ref3 = jax.nn.sigmoid(x3 @ weight.T + bias)
    assert out3.shape == (N3, 1)
    assert jnp.allclose(out3, ref3, atol=2e-6), (out3, ref3)

    print("KERNEL_OK")
</pallas_src>

<mosaic_0001>
module attributes {stable_mosaic.version = 11 : i64} {
  func.func @_logistic_kernel(%arg0: i32, %arg1: memref<3xf32, #tpu.memory_space<smem>>, %arg2: memref<2x8x128xf32, #tpu.memory_space<vmem>>, %arg3: memref<8x128xf32, #tpu.memory_space<vmem>>) attributes {dimension_semantics = [#tpu.dimension_semantics<parallel>], iteration_bounds = array<i64: 1>, scalar_prefetch = 1 : i64, scratch_operands = 0 : i64, tpu.core_type = #tpu.core_type<tc>, window_params = [{transform_indices = @transform_0, window_bounds = array<i64: 2, 8, 128>}, {transform_indices = @transform_1, window_bounds = array<i64: 8, 128>}]} {
    %c0 = arith.constant 0 : index
    %0 = memref.load %arg1[%c0] : memref<3xf32, #tpu.memory_space<smem>>
    %c1 = arith.constant 1 : index
    %1 = memref.load %arg1[%c1] : memref<3xf32, #tpu.memory_space<smem>>
    %c2 = arith.constant 2 : index
    %2 = memref.load %arg1[%c2] : memref<3xf32, #tpu.memory_space<smem>>
    %c0_0 = arith.constant 0 : index
    %c0_1 = arith.constant 0 : index
    %c0_2 = arith.constant 0 : index
    %3 = vector.load %arg2[%c0_0, %c0_1, %c0_2] : memref<2x8x128xf32, #tpu.memory_space<vmem>>, vector<1x8x128xf32>
    %4 = vector.shape_cast %3 : vector<1x8x128xf32> to vector<8x128xf32>
    %5 = vector.broadcast %0 : f32 to vector<8x128xf32>
    %6 = arith.mulf %4, %5 : vector<8x128xf32>
    %c1_3 = arith.constant 1 : index
    %c0_4 = arith.constant 0 : index
    %c0_5 = arith.constant 0 : index
    %7 = vector.load %arg2[%c1_3, %c0_4, %c0_5] : memref<2x8x128xf32, #tpu.memory_space<vmem>>, vector<1x8x128xf32>
    %8 = vector.shape_cast %7 : vector<1x8x128xf32> to vector<8x128xf32>
    %9 = vector.broadcast %1 : f32 to vector<8x128xf32>
    %10 = arith.mulf %8, %9 : vector<8x128xf32>
    %11 = arith.addf %6, %10 : vector<8x128xf32>
    %12 = vector.broadcast %2 : f32 to vector<8x128xf32>
    %13 = arith.addf %11, %12 : vector<8x128xf32>
    %cst = arith.constant 5.000000e-01 : f32
    %14 = vector.broadcast %cst : f32 to vector<8x128xf32>
    %15 = arith.mulf %14, %13 : vector<8x128xf32>
    %16 = math.tanh %15 : vector<8x128xf32>
    %cst_6 = arith.constant 5.000000e-01 : f32
    %17 = vector.broadcast %cst_6 : f32 to vector<8x128xf32>
    %18 = arith.mulf %17, %16 : vector<8x128xf32>
    %cst_7 = arith.constant 5.000000e-01 : f32
    %19 = vector.broadcast %cst_7 : f32 to vector<8x128xf32>
    %20 = arith.addf %18, %19 : vector<8x128xf32>
    %c0_8 = arith.constant 0 : index
    %c0_9 = arith.constant 0 : index
    %21 = vector.load %arg3[%c0_8, %c0_9] : memref<8x128xf32, #tpu.memory_space<vmem>>, vector<8x128xf32>
    tpu.vector_store %arg3[%c0_8, %c0_9], %20 {strides = array<i32>} : memref<8x128xf32, #tpu.memory_space<vmem>>, vector<8x128xf32>,
    return
  }
  func.func @transform_0(%arg0: i32, %arg1: memref<3xf32, #tpu.memory_space<smem>>) -> (i32, i32, i32) {
    %c0_i32 = arith.constant 0 : i32
    %c0_i32_0 = arith.constant 0 : i32
    %c0_i32_1 = arith.constant 0 : i32
    return %c0_i32, %arg0, %c0_i32_0 : i32, i32, i32
  }
  func.func @transform_1(%arg0: i32, %arg1: memref<3xf32, #tpu.memory_space<smem>>) -> (i32, i32) {
    %c0_i32 = arith.constant 0 : i32
    %c0_i32_0 = arith.constant 0 : i32
    return %arg0, %c0_i32 : i32, i32
  }
}

</mosaic_0001>

<llo_original>
// kernel: my_logistic_model.1
$region0: #{my_logistic_model.1}
  #allocation0 [shape = 'u32[]', space=smem, size = 0x4, offset = 0x4, fixed_abs, tag = 'smem constant byte address 0x4 - core index']
  #allocation1 [shape = 'u32[72,128]{1,0:T(1,128)}', space=vmem, size = 0x9000, scoped, tag = 'internal scratch']
  #allocation2 [shape = 's32[1]{0}', space=sflag, size = 0x4, scoped, tag = 'scoped memory for my_logistic_model.1']
  #allocation3 [shape = 'u8[512]{0}', space=smem, size = 0x200, scoped, tag = 'prefetched SMEM operand 0']
  %s0 = inlined_call_operand.vmem [shape: f32[3], index: 0, kind: input, shape index: {}]
  %s1 = inlined_call_operand.vmem [shape: f32[2,8,128], index: 1, kind: input, shape index: {}]
  %s2 = inlined_call_operand.vmem [shape: f32[8,128], index: 2, kind: output, shape index: {}]
  %s3 = sld [smem:[#allocation0]]
  $region14: #{my_logistic_model.1} parent=0
    _
  %s5 = ssub.s32 1, %s3
  %s6 = scalar_select 0, %s5, %s3
  %s8 = sshll.u32 %s0, 4
  %s9 = int_to_ptr.vmem [resolvable:$true] %s8
  %11 = dma.vmem_to_smem %s9, 16, [#allocation3], [#allocation2]
  %13 = dma.done [#allocation2], 16
  %14 = sfence
  // Predicated region
  $region2: #{my_logistic_model.1} parent=0 // pred_check
    _
  $region3: #{my_logistic_model.1} parent=0 // pred_check_branch
    %16 = sbr.rel (0) target = $region5
  $region4: #{my_logistic_model.1} parent=0 // pred_region
    _
  $region5: #{my_logistic_model.1} parent=0 // pred_fallthru
    _
  %s17 = sld [smem:[#allocation3]]
  %s18 = sld [smem:[#allocation3 + $0x1]]
  %s19 = sld [smem:[#allocation3 + $0x2]]
  %v20 = vld [vmem:[%s1] sm:$0xff]
  %v21 = vstv %s17
  %v22 = vmul.f32 %v20, %v21
  %s23 = scalar_lea.vmem %s1, 8
  %v24 = vld [vmem:[%s23] sm:$0xff]
  %v25 = vstv %s18
  %v26 = vmul.f32 %v24, %v25
  %v27 = vadd.f32 %v22, %v26
  %v28 = vstv %s19
  %v29 = vadd.f32 %v27, %v28
  %v30 = vmul.f32 %v29, 0.5
  %v31 = vtanh.pop %v30
  %v32 = vmul.f32 %v31, 0.5
  %v33 = vadd.f32 %v32, 0.5
  %34 = vst [vmem:[%s2] sm:$0xff] %v33
  // Predicated region
  $region6: #{my_logistic_model.1} parent=0 // pred_check
    _
  $region7: #{my_logistic_model.1} parent=0 // pred_check_branch
    %36 = sbr.rel (0) target = $region9
  $region8: #{my_logistic_model.1} parent=0 // pred_region
    _
  $region9: #{my_logistic_model.1} parent=0 // pred_fallthru
    _
  // Predicated region
  $region10: #{my_logistic_model.1} parent=0 // pred_check
    _
  $region11: #{my_logistic_model.1} parent=0 // pred_check_branch
    %38 = sbr.rel (0) target = $region13
  $region12: #{my_logistic_model.1} parent=0 // pred_region
    _
  $region13: #{my_logistic_model.1} parent=0 // pred_fallthru
    _

</llo_original>
